<compile_context>
chip_gen: v7x
topology: tpu7x:2x2x1
jax: 0.10.0
libtpu: 0.0.40
codegen_flags: <defaults>
</compile_context>

<pallas_src>
import math

import jax
import jax.numpy as jnp
from jax.experimental import pallas as pl
from jax.experimental.pallas import tpu as pltpu


def build_sincos_pe(max_len: int, d_model: int, dtype=jnp.float32):
    """Deterministic buffer setup, same formula as the nn.Module.

    Build this once per model, in the model dtype, and reuse it every call.
    """
    position = jnp.arange(max_len, dtype=jnp.float32)[:, None]            # [L, 1]
    div_term = jnp.exp(
        jnp.arange(0, d_model, 2, dtype=jnp.float32)
        * (-math.log(10000.0) / d_model)
    )                                                                      # [D/2]
    pe = jnp.zeros((max_len, d_model), dtype=jnp.float32)
    pe = pe.at[:, 0::2].set(jnp.sin(position * div_term))
    pe = pe.at[:, 1::2].set(jnp.cos(position * div_term))
    return pe.astype(dtype)                                               # [L, D]


# ----------------------------- kernels ------------------------------------


def _pe_add_kernel(x_ref, pe_ref, o_ref):
    # x_ref: (s_tile, B, D); pe_ref: (s_tile, D) broadcast over batch.
    o_ref[...] = (x_ref[...] + pe_ref[...][:, None, :]).astype(o_ref.dtype)


def _pe_add_dropout_kernel(x_ref, pe_ref, scale_ref, o_ref):
    # scale_ref holds 0 (dropped) or 1/(1-p) (kept), same dtype/shape as x.
    y = (x_ref[...] + pe_ref[...][:, None, :]) * scale_ref[...]
    o_ref[...] = y.astype(o_ref.dtype)


# ----------------------------- tiling -------------------------------------


def _round_up(n: int, m: int) -> int:
    return ((n + m - 1) // m) * m


def _choose_s_tile(S: int, B: int, D: int, dtype, n_bd_streams: int,
                   budget_bytes: int = 32 << 20, min_grid_steps: int = 4) -> int:
    """Largest seq tile (multiple of 8) whose double-buffered, layout-PADDED
    footprint fits `budget_bytes`.

    A (s_tile, B, D) block occupies vregs padded to
    (s_tile, round_up(B, sublane_min), round_up(D, 128)); sublane_min is 8 for
    4-byte, 16 for 2-byte, 32 for 1-byte dtypes.  Without this accounting a
    small batch (B=2) or narrow d_model silently multiplies VMEM use by 4-16x.
    """
    itemsize = jnp.dtype(dtype).itemsize
    sub_min = max(8, 32 // itemsize)
    pad_b = _round_up(B, sub_min)
    pad_d = _round_up(D, 128)
    # Per sequence-row bytes, double-buffered: n_bd_streams 3-D blocks
    # (x, out, [dropout scale]) plus the 2-D pe block.
    per_row = 2 * (n_bd_streams * pad_b + 1) * pad_d * itemsize
    s_tile = max(8, (budget_bytes // per_row) // 8 * 8)
    # Keep >= min_grid_steps tiles when the sequence is long enough so both
    # v7x TensorCores get work and double-buffering stays busy.
    if S >= min_grid_steps * 8:
        s_tile = min(s_tile, max(8, _round_up(pl.cdiv(S, min_grid_steps), 8)))
    return min(s_tile, _round_up(S, 8))


# ----------------------------- wrapper -------------------------------------


def positional_encoding_sincos(x, pe, *, p: float = 0.1, train: bool = False,
                               rng_key=None, seed: int = 0,
                               donate_x: bool = False):
    """Forward pass of PositionalEncodingSinCos.

    x : [S, B, D]   (seq_len, batch, d_model)
    pe: [max_len, D] sinusoidal table, ideally already in x.dtype
        (build it with build_sincos_pe(max_len, D, dtype=x.dtype)).
    In train mode the caller MUST pass a fresh rng_key (or seed) every step,
    otherwise the dropout mask repeats.
    """
    S, B, D = x.shape
    assert pe.ndim == 2 and pe.shape[1] == D and pe.shape[0] >= S
    if pe.dtype != x.dtype:
        # Fallback only; building pe in the model dtype avoids this extra pass.
        pe = pe.astype(x.dtype)

    apply_dropout = train and p > 0.0
    if apply_dropout and p >= 1.0:
        return jnp.zeros_like(x)                      # everything dropped

    itemsize = jnp.dtype(x.dtype).itemsize
    n_bd_streams = 3 if apply_dropout else 2          # x, out, [dropout scale]
    s_tile = _choose_s_tile(S, B, D, x.dtype, n_bd_streams)
    grid = (pl.cdiv(S, s_tile),)

    bytes_accessed = (n_bd_streams * S * B * D + S * D) * itemsize
    cost = pl.CostEstimate(flops=(2 if apply_dropout else 1) * S * B * D,
                           bytes_accessed=bytes_accessed, transcendentals=0)

    # NOTE: output stores are lane-dense (unmasked vst) only when
    # d_model % 128 == 0; for tiny d_model a plain XLA add may win on the
    # store side.  Batch-major callers ([B, S, D]) avoid the sublane-padded
    # batch broadcast entirely, but transposing here would cost an extra HBM
    # pass, so the module layout is kept as-is.
    compiler_params = pltpu.CompilerParams(
        dimension_semantics=("parallel",),   # shard seq tiles across TCs (v7x)
        vmem_limit_bytes=48 << 20,           # under v7x's 64 MiB physical VMEM
    )

    x_spec = pl.BlockSpec((s_tile, B, D), lambda i: (i, 0, 0))
    pe_spec = pl.BlockSpec((s_tile, D), lambda i: (i, 0))
    out_spec = pl.BlockSpec((s_tile, B, D), lambda i: (i, 0, 0))
    out_shape = jax.ShapeDtypeStruct((S, B, D), x.dtype)
    aliases = {0: 0} if donate_x else {}     # x's HBM buffer reused for output

    if not apply_dropout:
        return pl.pallas_call(
            _pe_add_kernel,
            out_shape=out_shape,
            grid=grid,
            in_specs=[x_spec, pe_spec],
            out_specs=out_spec,
            compiler_params=compiler_params,
            cost_estimate=cost,
            input_output_aliases=aliases,
        )(x, pe)

    # Inverted dropout: Bernoulli(1-p) keep mask, scaled by 1/(1-p), generated
    # with jax.random and streamed through the same pipeline as x.
    if rng_key is None:
        rng_key = jax.random.PRNGKey(seed)
    keep = jax.random.bernoulli(rng_key, 1.0 - p, (S, B, D))
    scale = keep.astype(x.dtype) * jnp.asarray(1.0 / (1.0 - p), x.dtype)

    return pl.pallas_call(
        _pe_add_dropout_kernel,
        out_shape=out_shape,
        grid=grid,
        in_specs=[x_spec, pe_spec, x_spec],   # scale uses the same tiling as x
        out_specs=out_spec,
        compiler_params=compiler_params,
        cost_estimate=cost,
        input_output_aliases=aliases,
    )(x, pe, scale)


# ------------------------------ demo / test ---------------------------------

if __name__ == "__main__":
    # Small shapes implied by the forward: [seq_len=8, batch=2, d_model=32]
    S, B, D = 8, 2, 32
    max_len = 64
    p = 0.1

    key = jax.random.PRNGKey(0)
    x = jax.random.normal(key, (S, B, D), dtype=jnp.float32)

    pe = build_sincos_pe(max_len, D, dtype=x.dtype)     # built once, model dtype
    ref = x + pe[:S][:, None, :]

    # Eval-mode forward (dropout is identity) — deterministic, verify exactly.
    out = jax.block_until_ready(positional_encoding_sincos(x, pe, p=p, train=False))
    assert out.shape == (S, B, D)
    assert out.dtype == x.dtype
    assert jnp.allclose(out, ref, atol=1e-6, rtol=1e-6), "eval mismatch vs reference"

    # Train-mode forward — every element is either 0 (dropped) or ref/(1-p).
    out_tr = jax.block_until_ready(
        positional_encoding_sincos(x, pe, p=p, train=True,
                                   rng_key=jax.random.PRNGKey(1234)))
    assert out_tr.shape == (S, B, D)
    kept = out_tr != 0.0
    diff = jnp.where(kept, out_tr - ref / (1.0 - p), 0.0)
    assert jnp.allclose(diff, 0.0, atol=1e-5), "train-mode values mismatch"

    # p >= 1 guard: everything dropped, no inf/NaN.
    out_all = jax.block_until_ready(
        positional_encoding_sincos(x, pe, p=1.0, train=True,
                                   rng_key=jax.random.PRNGKey(7)))
    assert jnp.all(out_all == 0.0)

    print("KERNEL_OK")
</pallas_src>

<mosaic_0001>
module attributes {stable_mosaic.version = 11 : i64} {
  func.func @_pe_add_kernel(%arg0: i32, %arg1: memref<8x2x32xf32, #tpu.memory_space<vmem>>, %arg2: memref<8x32xf32, #tpu.memory_space<vmem>>, %arg3: memref<8x2x32xf32, #tpu.memory_space<vmem>>) attributes {dimension_semantics = [#tpu.dimension_semantics<parallel>], iteration_bounds = array<i64: 1>, scalar_prefetch = 0 : i64, scratch_operands = 0 : i64, tpu.core_type = #tpu.core_type<tc>, window_params = [{transform_indices = @transform_0, window_bounds = array<i64: 8, 2, 32>}, {transform_indices = @transform_1, window_bounds = array<i64: 8, 32>}, {transform_indices = @transform_2, window_bounds = array<i64: 8, 2, 32>}]} {
    %c0 = arith.constant 0 : index
    %c0_0 = arith.constant 0 : index
    %c0_1 = arith.constant 0 : index
    %0 = vector.load %arg1[%c0, %c0_0, %c0_1] : memref<8x2x32xf32, #tpu.memory_space<vmem>>, vector<8x2x32xf32>
    %c0_2 = arith.constant 0 : index
    %c0_3 = arith.constant 0 : index
    %1 = vector.load %arg2[%c0_2, %c0_3] : memref<8x32xf32, #tpu.memory_space<vmem>>, vector<8x32xf32>
    %2 = vector.shape_cast %1 : vector<8x32xf32> to vector<8x1x32xf32>
    %3 = vector.broadcast %2 : vector<8x1x32xf32> to vector<8x2x32xf32>
    %4 = arith.addf %0, %3 : vector<8x2x32xf32>
    %c0_4 = arith.constant 0 : index
    %c0_5 = arith.constant 0 : index
    %c0_6 = arith.constant 0 : index
    %5 = vector.load %arg3[%c0_4, %c0_5, %c0_6] : memref<8x2x32xf32, #tpu.memory_space<vmem>>, vector<8x2x32xf32>
    tpu.vector_store %arg3[%c0_4, %c0_5, %c0_6], %4 {strides = array<i32>} : memref<8x2x32xf32, #tpu.memory_space<vmem>>, vector<8x2x32xf32>,
    return
  }
  func.func @transform_0(%arg0: i32) -> (i32, i32, i32) {
    %c0_i32 = arith.constant 0 : i32
    %c0_i32_0 = arith.constant 0 : i32
    %c0_i32_1 = arith.constant 0 : i32
    return %arg0, %c0_i32, %c0_i32_0 : i32, i32, i32
  }
  func.func @transform_1(%arg0: i32) -> (i32, i32) {
    %c0_i32 = arith.constant 0 : i32
    %c0_i32_0 = arith.constant 0 : i32
    return %arg0, %c0_i32 : i32, i32
  }
  func.func @transform_2(%arg0: i32) -> (i32, i32, i32) {
    %c0_i32 = arith.constant 0 : i32
    %c0_i32_0 = arith.constant 0 : i32
    %c0_i32_1 = arith.constant 0 : i32
    return %arg0, %c0_i32, %c0_i32_0 : i32, i32, i32
  }
}

</mosaic_0001>

<llo_original>
// kernel: tpu_custom_call.1
$region0: #{tpu_custom_call.1}
  #allocation0 [shape = 'u32[]', space=smem, size = 0x4, offset = 0x4, fixed_abs, tag = 'smem constant byte address 0x4 - core index']
  #allocation1 [shape = 'u32[144,128]{1,0:T(1,128)}', space=vmem, size = 0x12000, scoped, tag = 'internal scratch']
  %s0 = inlined_call_operand.vmem [shape: f32[8,2,32], index: 0, kind: input, shape index: {}]
  %s1 = inlined_call_operand.vmem [shape: f32[64,32], index: 1, kind: input, shape index: {}]
  %s2 = inlined_call_operand.hbm [shape: f32[8,2,32], index: 2, kind: output, shape index: {}]
  %s3 = sld [smem:[#allocation0]]
  $region18: #{tpu_custom_call.1} parent=0
    _
  %s5 = ssub.s32 1, %s3
  %s6 = scalar_select 0, %s5, %s3
  $region1: #{tpu_custom_call.1} parent=0
    #allocation2 [shape = 'u8[8192]{0}', space=vmem, size = 0x2000, scoped, tag = 'output window, operand 0, single buffered']
    #allocation3 [shape = 's32[1]{0}', space=sflag, size = 0x4, scoped, tag = 'scoped memory for tpu_custom_call.1']
    %7 = vsyncpa [#allocation3], 0
    // Predicated region
    $region2: #{tpu_custom_call.1} parent=1 // pred_check
      _
    $region3: #{tpu_custom_call.1} parent=1 // pred_check_branch
      %9 = sbr.rel (0) target = $region5
    $region4: #{tpu_custom_call.1} parent=1 // pred_region
      _
    $region5: #{tpu_custom_call.1} parent=1 // pred_fallthru
      _
    // Predicated region
    $region6: #{tpu_custom_call.1} parent=1 // pred_check
      _
    $region7: #{tpu_custom_call.1} parent=1 // pred_check_branch
      %11 = sbr.rel (0) target = $region9
    $region8: #{tpu_custom_call.1} parent=1 // pred_region
      _
    $region9: #{tpu_custom_call.1} parent=1 // pred_fallthru
      _
    %v12 = vld [vmem:[%s0] sm:$0x3]
    %v13 = vld [vmem:[%s0 + $0x2] sm:$0x3]
    %v14 = vld [vmem:[%s0 + $0x4] sm:$0x3]
    %v15 = vld [vmem:[%s0 + $0x6] sm:$0x3]
    %v16 = vld [vmem:[%s0 + $0x8] sm:$0x3]
    %v17 = vld [vmem:[%s0 + $0xa] sm:$0x3]
    %v18 = vld [vmem:[%s0 + $0xc] sm:$0x3]
    %v19 = vld [vmem:[%s0 + $0xe] sm:$0x3]
    %v20 = vld [vmem:[%s1] sm:$0xff]
    %v22 = vcombine.high %v20, %v20
    %v24 = vunpack.c.l.s4 1966171168
    %v25 = vunpack.c.0.s8 %v24
    %v26 = vlaneseq
    %v27 = vshrl.u32 %v26, 7
    %v28 = vsub.s32 %v25, %v27
    %v29 = vrot.slane %v20, %v28
    %v31 = vunpack.c.l.s4 1966171168
    %v32 = vunpack.c.0.s8 %v31
    %v33 = vlaneseq
    %v34 = vshrl.u32 %v33, 7
    %v35 = vsub.s32 %v32, %v34
    %v36 = vrot.slane %v22, %v35
    %v37 = vcombine.high %v29, %v29
    %v38 = vcombine.high %v36, %v36
    %v40 = vunpack.c.l.s4 1966171168
    %v41 = vunpack.c.0.s8 %v40
    %v42 = vlaneseq
    %v43 = vshrl.u32 %v42, 7
    %v44 = vsub.s32 %v41, %v43
    %v45 = vrot.slane %v29, %v44
    %v47 = vunpack.c.l.s4 1966171168
    %v48 = vunpack.c.0.s8 %v47
    %v49 = vlaneseq
    %v50 = vshrl.u32 %v49, 7
    %v51 = vsub.s32 %v48, %v50
    %v52 = vrot.slane %v36, %v51
    %v54 = vunpack.c.l.s4 1966171168
    %v55 = vunpack.c.0.s8 %v54
    %v56 = vlaneseq
    %v57 = vshrl.u32 %v56, 7
    %v58 = vsub.s32 %v55, %v57
    %v59 = vrot.slane %v37, %v58
    %v61 = vunpack.c.l.s4 1966171168
    %v62 = vunpack.c.0.s8 %v61
    %v63 = vlaneseq
    %v64 = vshrl.u32 %v63, 7
    %v65 = vsub.s32 %v62, %v64
    %v66 = vrot.slane %v38, %v65
    %v67 = vcombine.high %v45, %v45
    %v68 = vcombine.high %v52, %v52
    %v69 = vcombine.high %v59, %v59
    %v70 = vcombine.high %v66, %v66
    %v71 = vlaneseq
    %v72 = vshrl.u32 %v71, 7
    %v73 = vsub.s32 0, %v72
    %v74 = vrot.slane %v45, %v73
    %v75 = vlaneseq
    %v76 = vshrl.u32 %v75, 7
    %v77 = vsub.s32 0, %v76
    %v78 = vrot.slane %v59, %v77
    %v79 = vlaneseq
    %v80 = vshrl.u32 %v79, 7
    %v81 = vsub.s32 0, %v80
    %v82 = vrot.slane %v67, %v81
    %v83 = vlaneseq
    %v84 = vshrl.u32 %v83, 7
    %v85 = vsub.s32 0, %v84
    %v86 = vrot.slane %v69, %v85
    %v87 = vlaneseq
    %v88 = vshrl.u32 %v87, 7
    %v89 = vsub.s32 0, %v88
    %v90 = vrot.slane %v52, %v89
    %v91 = vlaneseq
    %v92 = vshrl.u32 %v91, 7
    %v93 = vsub.s32 0, %v92
    %v94 = vrot.slane %v66, %v93
    %v95 = vlaneseq
    %v96 = vshrl.u32 %v95, 7
    %v97 = vsub.s32 0, %v96
    %v98 = vrot.slane %v68, %v97
    %v99 = vlaneseq
    %v100 = vshrl.u32 %v99, 7
    %v101 = vsub.s32 0, %v100
    %v102 = vrot.slane %v70, %v101
    %v111 = vadd.f32 %v12, %v74
    %v112 = vadd.f32 %v13, %v78
    %v113 = vadd.f32 %v14, %v82
    %v114 = vadd.f32 %v15, %v86
    %v115 = vadd.f32 %v16, %v90
    %v116 = vadd.f32 %v17, %v94
    %v117 = vadd.f32 %v18, %v98
    %v118 = vadd.f32 %v19, %v102
    %vm119 = vcmask 254976
    %120 = vst.msk [vmem:[#allocation2] sm:$0x3] %vm119, %v111
    %121 = vst.msk [vmem:[#allocation2 + $0x2] sm:$0x3] %vm119, %v112
    %122 = vst.msk [vmem:[#allocation2 + $0x4] sm:$0x3] %vm119, %v113
    %123 = vst.msk [vmem:[#allocation2 + $0x6] sm:$0x3] %vm119, %v114
    %124 = vst.msk [vmem:[#allocation2 + $0x8] sm:$0x3] %vm119, %v115
    %125 = vst.msk [vmem:[#allocation2 + $0xa] sm:$0x3] %vm119, %v116
    %126 = vst.msk [vmem:[#allocation2 + $0xc] sm:$0x3] %vm119, %v117
    %127 = vst.msk [vmem:[#allocation2 + $0xe] sm:$0x3] %vm119, %v118
    // Predicated region
    $region10: #{tpu_custom_call.1} parent=1 // pred_check
      _
    $region11: #{tpu_custom_call.1} parent=1 // pred_check_branch
      %129 = sbr.rel (0) target = $region13
    $region12: #{tpu_custom_call.1} parent=1 // pred_region
      %s131 = ssub.s32 256, 256
      %132 = vsyncadd [#allocation3], %s131
      %s133 = sshll.u32 [#allocation2], 4
      %s134 = int_to_ptr.vmem [resolvable:$true] %s133
      %139 = dma.vmem_to_hbm [thread:$0]  %s134, 256, %s2, [#allocation3], 32, 32, 2
    $region13: #{tpu_custom_call.1} parent=1 // pred_fallthru
      _
    // Predicated region
    $region14: #{tpu_custom_call.1} parent=1 // pred_check
      _
    $region15: #{tpu_custom_call.1} parent=1 // pred_check_branch
      %141 = sbr.rel (0) target = $region17
    $region16: #{tpu_custom_call.1} parent=1 // pred_region
      %142 = dma.done [#allocation3], 256
    $region17: #{tpu_custom_call.1} parent=1 // pred_fallthru
      _
    %143 = vsyncpa [#allocation3], 1

</llo_original>
